<compile_context>
chip_gen: v7x
topology: tpu7x:2x2x1
jax: 0.10.0
libtpu: 0.0.40
codegen_flags: <defaults>
</compile_context>

<pallas_src>
import jax
import jax.numpy as jnp
from jax import lax
from jax.experimental import pallas as pl
from jax.experimental.pallas import tpu as pltpu

K7 = 7
PAD = (K7 - 1) // 2  # 3 ("same" padding for the 7x7 spatial-attention conv)


def _halo(W):
    # Zero halo on the flattened lane axis: must cover the largest spatial shift
    # (PAD rows + PAD cols) and be a multiple of 128 so post-roll slices stay aligned.
    return ((PAD * W + PAD + 127) // 128) * 128


def _make_mm2block_kernel(H, W, n_ch_total):
    HW = H * W
    halo = _halo(W)
    total = HW + 2 * halo
    inv_c = 1.0 / float(n_ch_total)

    def kernel(g_ref,      # (1, ch1, HW)   VMEM  bf16
               x_ref,      # (1, ch2, HW)   VMEM  bf16
               w7_ref,     # (14, 7)        VMEM  7x7 weights, row = 2*dy + [max, avg]
               w1_ref,     # (Cout, C)      VMEM  1x1 weights with BN scale folded in
               shift_ref,  # (Cout, 1)      VMEM  conv bias + BN shift, folded
               out_ref,    # (1, Cout, HW)  VMEM  lane-dense NCHW-flat output
               pad_sc):    # (2, total)     VMEM scratch, zero-halo pooled maps
        # ---- stage g|x into one (C, HW) buffer, upcast once ------------------------
        gx = jnp.concatenate([g_ref[0], x_ref[0]], axis=0)        # (C, HW) bf16
        gx = gx.astype(jnp.float32)                               # reused by pool + dot

        # ---- 1x1 conv (BN scale pre-folded) on the MXU ------------------------------
        # (gx*att) @ W == att * (gx @ W): do the matmul now so it is decoupled from the
        # serial pool -> 7x7 conv -> sigmoid chain below.
        y = jnp.dot(w1_ref[...], gx, preferred_element_type=jnp.float32)   # (Cout, HW)

        # ---- SpatialAttention pooled maps (single channel reductions) ---------------
        cmax = jnp.max(gx, axis=0, keepdims=True)                 # (1, HW)
        cavg = jnp.sum(gx, axis=0, keepdims=True) * inv_c         # (1, HW)
        packed = jnp.concatenate([cmax, cavg], axis=0)            # (2, HW)

        # Persistent zero-halo scratch.  A flat lane shift of dy*W+dx on this buffer is
        # exactly the 2-D (dy, dx) shift; out-of-image rows read the zero halo, and the
        # column wrap between adjacent rows is killed by the per-dx mask below.
        # Halo is re-zeroed every step (cheap aligned stores); init-once under
        # program_id(0)==0 would be wrong when the parallel axis is split across cores.
        pad_sc[:, 0:halo] = jnp.zeros((2, halo), jnp.float32)
        pad_sc[:, halo + HW:total] = jnp.zeros((2, halo), jnp.float32)
        pad_sc[:, halo:halo + HW] = packed
        padded = pad_sc[...]                                      # (2, total)

        # ---- 7x7 "same" conv (2 -> 1 ch, no bias), roll-decomposed ------------------
        # 6 dy rolls of (2,total), stack along sublanes, then 6 dx rolls shared across
        # all 7 row-shifts: 12 rolls / 7 FMAs instead of 48 rolls / 49 FMAs.
        rows = []
        for dy in range(K7):
            off = (dy - PAD) * W
            rows.append(padded if off == 0
                        else pltpu.roll(padded, (-off) % total, axis=1))
        stacked = jnp.concatenate(rows, axis=0)                   # (14, total)

        w7c = w7_ref[...]                                         # (14, 7), loaded once
        col = lax.broadcasted_iota(jnp.int32, (1, HW), 1) % W     # output column index
        acc = jnp.zeros((2 * K7, HW), jnp.float32)
        for dx in range(K7):
            c = dx - PAD
            shifted = stacked if c == 0 else pltpu.roll(stacked, (-c) % total, axis=1)
            taps = shifted[:, halo:halo + HW]                     # aligned (14, HW) slice
            term = w7c[:, dx:dx + 1] * taps                       # (14,1) * (14,HW) FMA
            if c != 0:
                # Source column col + c must stay inside [0, W) (independent of dy).
                cmask = ((col + c >= 0) & (col + c < W)).astype(jnp.float32)
                term = term * cmask
            acc = acc + term
        att = jax.nn.sigmoid(jnp.sum(acc, axis=0, keepdims=True))  # (1, HW)

        # ---- epilogue: attention, folded conv-bias + BN shift, ReLU -----------------
        out_ref[0] = jnp.maximum(y * att + shift_ref[...], 0.0)   # (Cout, HW)

    return kernel


def mm_2block_forward(g, x, params, compute_dtype=jnp.bfloat16):
    """g: (N, ch1, H, W), x: (N, ch2, H, W), float32 NCHW. Returns float32 NCHW,
    matching MM_2Block.forward (BatchNorm in inference mode, dropout disabled).
    g/x are cast to `compute_dtype` (default bf16) at the kernel boundary."""
    w7, w1, b1 = params["w7"], params["w1"], params["b1"]
    gamma, beta = params["gamma"], params["beta"]
    mean, var, eps = params["mean"], params["var"], params["eps"]

    N, ch1, H, W = g.shape
    ch2 = x.shape[1]
    C = ch1 + ch2
    Cout = w1.shape[1]
    HW = H * W
    # Lane-dense blocks need the flattened spatial extent to be a multiple of 128.
    # TODO(synk): for general shapes (14x14, 28x28, large C*HW), tile H with a 3-row
    # halo on the pooled map (re-derive the tile for v7x 64 MiB / v5e 16 MiB scoped
    # VMEM) and split HW when N==1 so both v7x TensorCores get work.
    assert HW % 128 == 0, f"H*W={HW} must be a multiple of 128 for this kernel"

    # Free reshapes + bf16 cast — no concat / transpose / pad HBM passes in the wrapper.
    g3 = g.reshape(N, ch1, HW).astype(compute_dtype)
    x3 = x.reshape(N, ch2, HW).astype(compute_dtype)

    # Fold BN scale into the 1x1 weights (exact: diag scale commutes with the matmul)
    # and conv bias + BN shift into a single per-channel shift.
    inv_std = gamma / jnp.sqrt(var + eps)
    w1s = (jnp.transpose(w1) * inv_std[:, None]).astype(jnp.float32)   # (Cout, C)
    shift = ((b1 - mean) * inv_std + beta).reshape(Cout, 1).astype(jnp.float32)

    # 7x7 weights pre-stacked as (14, 7): row = 2*dy + pool(0=max,1=avg), col = dx.
    w7c = jnp.transpose(w7.reshape(2, K7, K7), (1, 0, 2)).reshape(2 * K7, K7)
    w7c = w7c.astype(jnp.float32)

    kernel = _make_mm2block_kernel(H, W, C)
    out3 = pl.pallas_call(
        kernel,
        out_shape=jax.ShapeDtypeStruct((N, Cout, HW), jnp.float32),
        grid_spec=pltpu.PrefetchScalarGridSpec(
            num_scalar_prefetch=0,
            grid=(N,),   # one image per step; N=2 keeps both v7x TensorCores busy
            in_specs=[
                pl.BlockSpec((1, ch1, HW), lambda n: (n, 0, 0)),
                pl.BlockSpec((1, ch2, HW), lambda n: (n, 0, 0)),
                pl.BlockSpec((2 * K7, K7), lambda n: (0, 0)),
                pl.BlockSpec((Cout, C), lambda n: (0, 0)),
                pl.BlockSpec((Cout, 1), lambda n: (0, 0)),
            ],
            out_specs=pl.BlockSpec((1, Cout, HW), lambda n: (n, 0, 0)),
            scratch_shapes=[pltpu.VMEM((2, HW + 2 * _halo(W)), jnp.float32)],
        ),
        compiler_params=pltpu.CompilerParams(
            dimension_semantics=("parallel",),
            # Explicit cap (per-step footprint here is only tens of KiB); re-derive the
            # block budget / tile HW before raising this for large C*HW on v7x / v5e.
            vmem_limit_bytes=64 << 20,
        ),
    )(g3, x3, w7c, w1s, shift)

    return out3.reshape(N, Cout, H, W)   # free: (Cout, H*W) is already NCHW element order


def mm_2block_reference(g, x, params):
    """Pure-JAX reference mirroring the PyTorch forward (NCHW, f32 HIGHEST)."""
    w7, w1, b1 = params["w7"], params["w1"], params["b1"]
    gamma, beta = params["gamma"], params["beta"]
    mean, var, eps = params["mean"], params["var"], params["eps"]

    gx = jnp.concatenate([g, x], axis=1)
    max_pool = jnp.max(gx, axis=1, keepdims=True)
    avg_pool = jnp.mean(gx, axis=1, keepdims=True)
    pool = jnp.concatenate([max_pool, avg_pool], axis=1)      # (N, 2, H, W)
    att = lax.conv_general_dilated(
        pool, w7.reshape(1, 2, K7, K7), (1, 1), ((PAD, PAD), (PAD, PAD)),
        dimension_numbers=("NCHW", "OIHW", "NCHW"),
        precision=lax.Precision.HIGHEST)
    att = jax.nn.sigmoid(att)                                 # (N, 1, H, W)
    gxs = gx * att
    y = jnp.einsum("nchw,co->nohw", gxs, w1,
                   precision=lax.Precision.HIGHEST) + b1[None, :, None, None]
    y = (y - mean[None, :, None, None]) / jnp.sqrt(var[None, :, None, None] + eps)
    y = y * gamma[None, :, None, None] + beta[None, :, None, None]
    return jnp.maximum(y, 0.0)


if __name__ == "__main__":
    key = jax.random.PRNGKey(0)
    ch_1, ch_2, H, W, N = 4, 4, 16, 16, 2
    C = ch_1 + ch_2
    Cout = ch_1 + ch_2   # out_channels = ch_1 + ch_2 in MM_2Block.__init__

    ks = jax.random.split(key, 8)
    g = jax.random.normal(ks[0], (N, ch_1, H, W), jnp.float32)
    x = jax.random.normal(ks[1], (N, ch_2, H, W), jnp.float32)

    params = dict(
        w7=0.1 * jax.random.normal(ks[2], (2, K7, K7), jnp.float32),   # SpatialAttention.conv (1,2,7,7), no bias
        w1=0.2 * jax.random.normal(ks[3], (C, Cout), jnp.float32),     # combine_and_expand 1x1 conv weight (Cin,Cout)
        b1=0.1 * jax.random.normal(ks[4], (Cout,), jnp.float32),       # 1x1 conv bias
        gamma=1.0 + 0.1 * jax.random.normal(ks[5], (Cout,), jnp.float32),  # BN weight
        beta=0.1 * jax.random.normal(ks[6], (Cout,), jnp.float32),         # BN bias
        mean=0.05 * jax.random.normal(ks[7], (Cout,), jnp.float32),        # BN running_mean
        var=0.9 * jnp.ones((Cout,), jnp.float32),                          # BN running_var
        eps=1e-5,
    )

    out = mm_2block_forward(g, x, params)
    jax.block_until_ready(out)

    ref = mm_2block_reference(g, x, params)
    assert out.shape == (N, Cout, H, W), out.shape
    max_err = float(jnp.max(jnp.abs(out - ref)))
    # Tolerance accounts for the deliberate bf16 cast of g/x at the kernel boundary
    # (per the perf review: HBM-bandwidth win; the MXU default precision was already a
    # bf16 pass).  Pass compute_dtype=jnp.float32 for tighter parity if required.
    assert jnp.allclose(out, ref, atol=3e-2, rtol=2e-2), f"max_err={max_err}"

    print("KERNEL_OK")
</pallas_src>

<mosaic_0001>
module attributes {stable_mosaic.version = 11 : i64} {
  func.func @kernel(%arg0: i32, %arg1: memref<1x4x256xbf16, #tpu.memory_space<vmem>>, %arg2: memref<1x4x256xbf16, #tpu.memory_space<vmem>>, %arg3: memref<14x7xf32, #tpu.memory_space<vmem>>, %arg4: memref<8x8xf32, #tpu.memory_space<vmem>>, %arg5: memref<8x1xf32, #tpu.memory_space<vmem>>, %arg6: memref<1x8x256xf32, #tpu.memory_space<vmem>>, %arg7: memref<2x512xf32, #tpu.memory_space<vmem>>) attributes {dimension_semantics = [#tpu.dimension_semantics<parallel>], iteration_bounds = array<i64: 2>, scalar_prefetch = 0 : i64, scratch_operands = 1 : i64, tpu.core_type = #tpu.core_type<tc>, window_params = [{transform_indices = @transform_0, window_bounds = array<i64: 1, 4, 256>}, {transform_indices = @transform_1, window_bounds = array<i64: 1, 4, 256>}, {pipeline_mode = #tpu.pipeline_mode<synchronous>, transform_indices = @transform_2, window_bounds = array<i64: 14, 7>}, {pipeline_mode = #tpu.pipeline_mode<synchronous>, transform_indices = @transform_3, window_bounds = array<i64: 8, 8>}, {pipeline_mode = #tpu.pipeline_mode<synchronous>, transform_indices = @transform_4, window_bounds = array<i64: 8, 1>}, {transform_indices = @transform_5, window_bounds = array<i64: 1, 8, 256>}]} {
    %c0 = arith.constant 0 : index
    %c0_0 = arith.constant 0 : index
    %c0_1 = arith.constant 0 : index
    %0 = vector.load %arg1[%c0, %c0_0, %c0_1] : memref<1x4x256xbf16, #tpu.memory_space<vmem>>, vector<1x4x256xbf16>
    %1 = vector.shape_cast %0 : vector<1x4x256xbf16> to vector<4x256xbf16>
    %c0_2 = arith.constant 0 : index
    %c0_3 = arith.constant 0 : index
    %c0_4 = arith.constant 0 : index
    %2 = vector.load %arg2[%c0_2, %c0_3, %c0_4] : memref<1x4x256xbf16, #tpu.memory_space<vmem>>, vector<1x4x256xbf16>
    %3 = vector.shape_cast %2 : vector<1x4x256xbf16> to vector<4x256xbf16>
    %4 = tpu.concatenate %1, %3 in 0 : vector<4x256xbf16>, vector<4x256xbf16> -> vector<8x256xbf16>
    %5 = arith.extf %4 : vector<8x256xbf16> to vector<8x256xf32>
    %c0_5 = arith.constant 0 : index
    %c0_6 = arith.constant 0 : index
    %6 = vector.load %arg4[%c0_5, %c0_6] : memref<8x8xf32, #tpu.memory_space<vmem>>, vector<8x8xf32>
    %cst = arith.constant dense<0.000000e+00> : vector<8x256xf32>
    %7 = tpu.matmul %6, %5, %cst {dimension_numbers = #tpu.dot_dimension_numbers<[1], [0], [0], [1], [0, 0, 1, 1], [], []>} : vector<8x8xf32>, vector<8x256xf32>, vector<8x256xf32> -> vector<8x256xf32>
    %cst_7 = arith.constant dense<0xFF800000> : vector<256xf32>
    %8 = vector.multi_reduction <maximumf>, %5, %cst_7 [0] : vector<8x256xf32> to vector<256xf32>
    %9 = vector.shape_cast %8 : vector<256xf32> to vector<1x256xf32>
    %cst_8 = arith.constant dense<0.000000e+00> : vector<256xf32>
    %10 = vector.multi_reduction <add>, %5, %cst_8 [0] : vector<8x256xf32> to vector<256xf32>
    %11 = vector.shape_cast %10 : vector<256xf32> to vector<1x256xf32>
    %cst_9 = arith.constant 1.250000e-01 : f32
    %12 = vector.broadcast %cst_9 : f32 to vector<1x256xf32>
    %13 = arith.mulf %11, %12 : vector<1x256xf32>
    %14 = tpu.concatenate %9, %13 in 0 : vector<1x256xf32>, vector<1x256xf32> -> vector<2x256xf32>
    %cst_10 = arith.constant 0.000000e+00 : f32
    %15 = vector.broadcast %cst_10 : f32 to vector<2x128xf32>
    %c0_11 = arith.constant 0 : index
    %c0_12 = arith.constant 0 : index
    %16 = vector.load %arg7[%c0_11, %c0_12] : memref<2x512xf32, #tpu.memory_space<vmem>>, vector<2x128xf32>
    tpu.vector_store %arg7[%c0_11, %c0_12], %15 {strides = array<i32>} : memref<2x512xf32, #tpu.memory_space<vmem>>, vector<2x128xf32>,
    %cst_13 = arith.constant 0.000000e+00 : f32
    %17 = vector.broadcast %cst_13 : f32 to vector<2x128xf32>
    %c0_14 = arith.constant 0 : index
    %c384 = arith.constant 384 : index
    %18 = vector.load %arg7[%c0_14, %c384] : memref<2x512xf32, #tpu.memory_space<vmem>>, vector<2x128xf32>
    tpu.vector_store %arg7[%c0_14, %c384], %17 {strides = array<i32>} : memref<2x512xf32, #tpu.memory_space<vmem>>, vector<2x128xf32>,
    %c0_15 = arith.constant 0 : index
    %c128 = arith.constant 128 : index
    %19 = vector.load %arg7[%c0_15, %c128] : memref<2x512xf32, #tpu.memory_space<vmem>>, vector<2x256xf32>
    tpu.vector_store %arg7[%c0_15, %c128], %14 {strides = array<i32>} : memref<2x512xf32, #tpu.memory_space<vmem>>, vector<2x256xf32>,
    %c0_16 = arith.constant 0 : index
    %c0_17 = arith.constant 0 : index
    %20 = vector.load %arg7[%c0_16, %c0_17] : memref<2x512xf32, #tpu.memory_space<vmem>>, vector<2x512xf32>
    %c48_i32 = arith.constant 48 : i32
    %21 = tpu.dynamic_rotate %20 by %c48_i32 dim 1 : vector<2x512xf32>, i32 -> vector<2x512xf32>
    %c32_i32 = arith.constant 32 : i32
    %22 = tpu.dynamic_rotate %20 by %c32_i32 dim 1 : vector<2x512xf32>, i32 -> vector<2x512xf32>
    %c16_i32 = arith.constant 16 : i32
    %23 = tpu.dynamic_rotate %20 by %c16_i32 dim 1 : vector<2x512xf32>, i32 -> vector<2x512xf32>
    %c496_i32 = arith.constant 496 : i32
    %24 = tpu.dynamic_rotate %20 by %c496_i32 dim 1 : vector<2x512xf32>, i32 -> vector<2x512xf32>
    %c480_i32 = arith.constant 480 : i32
    %25 = tpu.dynamic_rotate %20 by %c480_i32 dim 1 : vector<2x512xf32>, i32 -> vector<2x512xf32>
    %c464_i32 = arith.constant 464 : i32
    %26 = tpu.dynamic_rotate %20 by %c464_i32 dim 1 : vector<2x512xf32>, i32 -> vector<2x512xf32>
    %27 = tpu.concatenate %21, %22, %23, %20, %24, %25, %26 in 0 : vector<2x512xf32>, vector<2x512xf32>, vector<2x512xf32>, vector<2x512xf32>, vector<2x512xf32>, vector<2x512xf32>, vector<2x512xf32> -> vector<14x512xf32>
    %c0_18 = arith.constant 0 : index
    %c0_19 = arith.constant 0 : index
    %28 = vector.load %arg3[%c0_18, %c0_19] : memref<14x7xf32, #tpu.memory_space<vmem>>, vector<14x7xf32>
    %29 = tpu.iota {dimensions = array<i32: 1>} : vector<1x256xi32>
    %c16_i32_20 = arith.constant 16 : i32
    %c0_i32 = arith.constant 0 : i32
    %30 = arith.cmpi eq, %c16_i32_20, %c0_i32 : i32
    %c1_i32 = arith.constant 1 : i32
    %31 = arith.select %30, %c1_i32, %c16_i32_20 : i32
    %32 = vector.broadcast %31 : i32 to vector<1x256xi32>
    %33 = arith.remsi %29, %32 : vector<1x256xi32>
    %c0_i32_21 = arith.constant 0 : i32
    %34 = vector.broadcast %c0_i32_21 : i32 to vector<1x256xi32>
    %35 = arith.cmpi ne, %33, %34 : vector<1x256xi32>
    %c0_i32_22 = arith.constant 0 : i32
    %36 = vector.broadcast %c0_i32_22 : i32 to vector<1x256xi32>
    %37 = arith.cmpi slt, %33, %36 : vector<1x256xi32>
    %c0_i32_23 = arith.constant 0 : i32
    %38 = arith.cmpi slt, %31, %c0_i32_23 : i32
    %39 = vector.broadcast %38 : i1 to vector<1x256xi1>
    %40 = vector.broadcast %39 : vector<1x256xi1> to vector<1x256xi1>
    %41 = arith.xori %37, %40 : vector<1x256xi1>
    %42 = arith.andi %41, %35 : vector<1x256xi1>
    %43 = vector.broadcast %31 : i32 to vector<1x256xi32>
    %44 = arith.addi %33, %43 : vector<1x256xi32>
    %45 = arith.select %42, %44, %33 : vector<1x256xi1>, vector<1x256xi32>
    %cst_24 = arith.constant 0.000000e+00 : f32
    %46 = vector.broadcast %cst_24 : f32 to vector<14x256xf32>
    %c3_i32 = arith.constant 3 : i32
    %47 = tpu.dynamic_rotate %27 by %c3_i32 dim 1 : vector<14x512xf32>, i32 -> vector<14x512xf32>
    %48 = vector.extract_strided_slice %47 {offsets = [0, 128], sizes = [14, 256], strides = [1, 1]} : vector<14x512xf32> to vector<14x256xf32>
    %49 = vector.extract_strided_slice %28 {offsets = [0, 0], sizes = [14, 1], strides = [1, 1]} : vector<14x7xf32> to vector<14x1xf32>
    %50 = vector.broadcast %49 : vector<14x1xf32> to vector<14x256xf32>
    %51 = arith.mulf %50, %48 : vector<14x256xf32>
    %c-3_i32 = arith.constant -3 : i32
    %52 = vector.broadcast %c-3_i32 : i32 to vector<1x256xi32>
    %53 = arith.addi %45, %52 : vector<1x256xi32>
    %c0_i32_25 = arith.constant 0 : i32
    %54 = vector.broadcast %c0_i32_25 : i32 to vector<1x256xi32>
    %55 = arith.cmpi sge, %53, %54 : vector<1x256xi32>
    %c-3_i32_26 = arith.constant -3 : i32
    %56 = vector.broadcast %c-3_i32_26 : i32 to vector<1x256xi32>
    %57 = arith.addi %45, %56 : vector<1x256xi32>
    %c16_i32_27 = arith.constant 16 : i32
    %58 = vector.broadcast %c16_i32_27 : i32 to vector<1x256xi32>
    %59 = arith.cmpi slt, %57, %58 : vector<1x256xi32>
    %60 = arith.andi %55, %59 : vector<1x256xi1>
    %61 = arith.extui %60 : vector<1x256xi1> to vector<1x256xi32>
    %62 = arith.sitofp %61 : vector<1x256xi32> to vector<1x256xf32>
    %63 = vector.broadcast %62 : vector<1x256xf32> to vector<14x256xf32>
    %64 = arith.mulf %51, %63 : vector<14x256xf32>
    %65 = arith.addf %46, %64 : vector<14x256xf32>
    %c2_i32 = arith.constant 2 : i32
    %66 = tpu.dynamic_rotate %27 by %c2_i32 dim 1 : vector<14x512xf32>, i32 -> vector<14x512xf32>
    %67 = vector.extract_strided_slice %66 {offsets = [0, 128], sizes = [14, 256], strides = [1, 1]} : vector<14x512xf32> to vector<14x256xf32>
    %68 = vector.extract_strided_slice %28 {offsets = [0, 1], sizes = [14, 1], strides = [1, 1]} : vector<14x7xf32> to vector<14x1xf32>
    %69 = vector.broadcast %68 : vector<14x1xf32> to vector<14x256xf32>
    %70 = arith.mulf %69, %67 : vector<14x256xf32>
    %c-2_i32 = arith.constant -2 : i32
    %71 = vector.broadcast %c-2_i32 : i32 to vector<1x256xi32>
    %72 = arith.addi %45, %71 : vector<1x256xi32>
    %c0_i32_28 = arith.constant 0 : i32
    %73 = vector.broadcast %c0_i32_28 : i32 to vector<1x256xi32>
    %74 = arith.cmpi sge, %72, %73 : vector<1x256xi32>
    %c-2_i32_29 = arith.constant -2 : i32
    %75 = vector.broadcast %c-2_i32_29 : i32 to vector<1x256xi32>
    %76 = arith.addi %45, %75 : vector<1x256xi32>
    %c16_i32_30 = arith.constant 16 : i32
    %77 = vector.broadcast %c16_i32_30 : i32 to vector<1x256xi32>
    %78 = arith.cmpi slt, %76, %77 : vector<1x256xi32>
    %79 = arith.andi %74, %78 : vector<1x256xi1>
    %80 = arith.extui %79 : vector<1x256xi1> to vector<1x256xi32>
    %81 = arith.sitofp %80 : vector<1x256xi32> to vector<1x256xf32>
    %82 = vector.broadcast %81 : vector<1x256xf32> to vector<14x256xf32>
    %83 = arith.mulf %70, %82 : vector<14x256xf32>
    %84 = arith.addf %65, %83 : vector<14x256xf32>
    %c1_i32_31 = arith.constant 1 : i32
    %85 = tpu.dynamic_rotate %27 by %c1_i32_31 dim 1 : vector<14x512xf32>, i32 -> vector<14x512xf32>
    %86 = vector.extract_strided_slice %85 {offsets = [0, 128], sizes = [14, 256], strides = [1, 1]} : vector<14x512xf32> to vector<14x256xf32>
    %87 = vector.extract_strided_slice %28 {offsets = [0, 2], sizes = [14, 1], strides = [1, 1]} : vector<14x7xf32> to vector<14x1xf32>
    %88 = vector.broadcast %87 : vector<14x1xf32> to vector<14x256xf32>
    %89 = arith.mulf %88, %86 : vector<14x256xf32>
    %c-1_i32 = arith.constant -1 : i32
    %90 = vector.broadcast %c-1_i32 : i32 to vector<1x256xi32>
    %91 = arith.addi %45, %90 : vector<1x256xi32>
    %c0_i32_32 = arith.constant 0 : i32
    %92 = vector.broadcast %c0_i32_32 : i32 to vector<1x256xi32>
    %93 = arith.cmpi sge, %91, %92 : vector<1x256xi32>
    %c-1_i32_33 = arith.constant -1 : i32
    %94 = vector.broadcast %c-1_i32_33 : i32 to vector<1x256xi32>
    %95 = arith.addi %45, %94 : vector<1x256xi32>
    %c16_i32_34 = arith.constant 16 : i32
    %96 = vector.broadcast %c16_i32_34 : i32 to vector<1x256xi32>
    %97 = arith.cmpi slt, %95, %96 : vector<1x256xi32>
    %98 = arith.andi %93, %97 : vector<1x256xi1>
    %99 = arith.extui %98 : vector<1x256xi1> to vector<1x256xi32>
    %100 = arith.sitofp %99 : vector<1x256xi32> to vector<1x256xf32>
    %101 = vector.broadcast %100 : vector<1x256xf32> to vector<14x256xf32>
    %102 = arith.mulf %89, %101 : vector<14x256xf32>
    %103 = arith.addf %84, %102 : vector<14x256xf32>
    %104 = vector.extract_strided_slice %27 {offsets = [0, 128], sizes = [14, 256], strides = [1, 1]} : vector<14x512xf32> to vector<14x256xf32>
    %105 = vector.extract_strided_slice %28 {offsets = [0, 3], sizes = [14, 1], strides = [1, 1]} : vector<14x7xf32> to vector<14x1xf32>
    %106 = vector.broadcast %105 : vector<14x1xf32> to vector<14x256xf32>
    %107 = arith.mulf %106, %104 : vector<14x256xf32>
    %108 = arith.addf %103, %107 : vector<14x256xf32>
    %c511_i32 = arith.constant 511 : i32
    %109 = tpu.dynamic_rotate %27 by %c511_i32 dim 1 : vector<14x512xf32>, i32 -> vector<14x512xf32>
    %110 = vector.extract_strided_slice %109 {offsets = [0, 128], sizes = [14, 256], strides = [1, 1]} : vector<14x512xf32> to vector<14x256xf32>
    %111 = vector.extract_strided_slice %28 {offsets = [0, 4], sizes = [14, 1], strides = [1, 1]} : vector<14x7xf32> to vector<14x1xf32>
    %112 = vector.broadcast %111 : vector<14x1xf32> to vector<14x256xf32>
    %113 = arith.mulf %112, %110 : vector<14x256xf32>
    %c1_i32_35 = arith.constant 1 : i32
    %114 = vector.broadcast %c1_i32_35 : i32 to vector<1x256xi32>
    %115 = arith.addi %45, %114 : vector<1x256xi32>
    %c0_i32_36 = arith.constant 0 : i32
    %116 = vector.broadcast %c0_i32_36 : i32 to vector<1x256xi32>
    %117 = arith.cmpi sge, %115, %116 : vector<1x256xi32>
    %c1_i32_37 = arith.constant 1 : i32
    %118 = vector.broadcast %c1_i32_37 : i32 to vector<1x256xi32>
    %119 = arith.addi %45, %118 : vector<1x256xi32>
    %c16_i32_38 = arith.constant 16 : i32
    %120 = vector.broadcast %c16_i32_38 : i32 to vector<1x256xi32>
    %121 = arith.cmpi slt, %119, %120 : vector<1x256xi32>
    %122 = arith.andi %117, %121 : vector<1x256xi1>
    %123 = arith.extui %122 : vector<1x256xi1> to vector<1x256xi32>
    %124 = arith.sitofp %123 : vector<1x256xi32> to vector<1x256xf32>
    %125 = vector.broadcast %124 : vector<1x256xf32> to vector<14x256xf32>
    %126 = arith.mulf %113, %125 : vector<14x256xf32>
    %127 = arith.addf %108, %126 : vector<14x256xf32>
    %c510_i32 = arith.constant 510 : i32
    %128 = tpu.dynamic_rotate %27 by %c510_i32 dim 1 : vector<14x512xf32>, i32 -> vector<14x512xf32>
    %129 = vector.extract_strided_slice %128 {offsets = [0, 128], sizes = [14, 256], strides = [1, 1]} : vector<14x512xf32> to vector<14x256xf32>
    %130 = vector.extract_strided_slice %28 {offsets = [0, 5], sizes = [14, 1], strides = [1, 1]} : vector<14x7xf32> to vector<14x1xf32>
    %131 = vector.broadcast %130 : vector<14x1xf32> to vector<14x256xf32>
    %132 = arith.mulf %131, %129 : vector<14x256xf32>
    %c2_i32_39 = arith.constant 2 : i32
    %133 = vector.broadcast %c2_i32_39 : i32 to vector<1x256xi32>
    %134 = arith.addi %45, %133 : vector<1x256xi32>
    %c0_i32_40 = arith.constant 0 : i32
    %135 = vector.broadcast %c0_i32_40 : i32 to vector<1x256xi32>
    %136 = arith.cmpi sge, %134, %135 : vector<1x256xi32>
    %c2_i32_41 = arith.constant 2 : i32
    %137 = vector.broadcast %c2_i32_41 : i32 to vector<1x256xi32>
    %138 = arith.addi %45, %137 : vector<1x256xi32>
    %c16_i32_42 = arith.constant 16 : i32
    %139 = vector.broadcast %c16_i32_42 : i32 to vector<1x256xi32>
    %140 = arith.cmpi slt, %138, %139 : vector<1x256xi32>
    %141 = arith.andi %136, %140 : vector<1x256xi1>
    %142 = arith.extui %141 : vector<1x256xi1> to vector<1x256xi32>
    %143 = arith.sitofp %142 : vector<1x256xi32> to vector<1x256xf32>
    %144 = vector.broadcast %143 : vector<1x256xf32> to vector<14x256xf32>
    %145 = arith.mulf %132, %144 : vector<14x256xf32>
    %146 = arith.addf %127, %145 : vector<14x256xf32>
    %c509_i32 = arith.constant 509 : i32
    %147 = tpu.dynamic_rotate %27 by %c509_i32 dim 1 : vector<14x512xf32>, i32 -> vector<14x512xf32>
    %148 = vector.extract_strided_slice %147 {offsets = [0, 128], sizes = [14, 256], strides = [1, 1]} : vector<14x512xf32> to vector<14x256xf32>
    %149 = vector.extract_strided_slice %28 {offsets = [0, 6], sizes = [14, 1], strides = [1, 1]} : vector<14x7xf32> to vector<14x1xf32>
    %150 = vector.broadcast %149 : vector<14x1xf32> to vector<14x256xf32>
    %151 = arith.mulf %150, %148 : vector<14x256xf32>
    %c3_i32_43 = arith.constant 3 : i32
    %152 = vector.broadcast %c3_i32_43 : i32 to vector<1x256xi32>
    %153 = arith.addi %45, %152 : vector<1x256xi32>
    %c0_i32_44 = arith.constant 0 : i32
    %154 = vector.broadcast %c0_i32_44 : i32 to vector<1x256xi32>
    %155 = arith.cmpi sge, %153, %154 : vector<1x256xi32>
    %c3_i32_45 = arith.constant 3 : i32
    %156 = vector.broadcast %c3_i32_45 : i32 to vector<1x256xi32>
    %157 = arith.addi %45, %156 : vector<1x256xi32>
    %c16_i32_46 = arith.constant 16 : i32
    %158 = vector.broadcast %c16_i32_46 : i32 to vector<1x256xi32>
    %159 = arith.cmpi slt, %157, %158 : vector<1x256xi32>
    %160 = arith.andi %155, %159 : vector<1x256xi1>
    %161 = arith.extui %160 : vector<1x256xi1> to vector<1x256xi32>
    %162 = arith.sitofp %161 : vector<1x256xi32> to vector<1x256xf32>
    %163 = vector.broadcast %162 : vector<1x256xf32> to vector<14x256xf32>
    %164 = arith.mulf %151, %163 : vector<14x256xf32>
    %165 = arith.addf %146, %164 : vector<14x256xf32>
    %cst_47 = arith.constant dense<0.000000e+00> : vector<256xf32>
    %166 = vector.multi_reduction <add>, %165, %cst_47 [0] : vector<14x256xf32> to vector<256xf32>
    %167 = vector.shape_cast %166 : vector<256xf32> to vector<1x256xf32>
    %168 = arith.negf %167 : vector<1x256xf32>
    %169 = math.exp %168 : vector<1x256xf32>
    %cst_48 = arith.constant 1.000000e+00 : f32
    %170 = vector.broadcast %cst_48 : f32 to vector<1x256xf32>
    %171 = arith.addf %170, %169 : vector<1x256xf32>
    %172 = arith.divf %170, %171 : vector<1x256xf32>
    %173 = vector.broadcast %172 : vector<1x256xf32> to vector<8x256xf32>
    %174 = arith.mulf %7, %173 : vector<8x256xf32>
    %c0_49 = arith.constant 0 : index
    %c0_50 = arith.constant 0 : index
    %175 = vector.load %arg5[%c0_49, %c0_50] : memref<8x1xf32, #tpu.memory_space<vmem>>, vector<8x1xf32>
    %176 = vector.broadcast %175 : vector<8x1xf32> to vector<8x256xf32>
    %177 = arith.addf %174, %176 : vector<8x256xf32>
    %cst_51 = arith.constant 0.000000e+00 : f32
    %178 = vector.broadcast %cst_51 : f32 to vector<8x256xf32>
    %179 = arith.maximumf %177, %178 : vector<8x256xf32>
    %c0_52 = arith.constant 0 : index
    %c0_53 = arith.constant 0 : index
    %c0_54 = arith.constant 0 : index
    %180 = vector.load %arg6[%c0_52, %c0_53, %c0_54] : memref<1x8x256xf32, #tpu.memory_space<vmem>>, vector<1x8x256xf32>
    %181 = vector.shape_cast %180 : vector<1x8x256xf32> to vector<8x256xf32>
    %182 = vector.shape_cast %179 : vector<8x256xf32> to vector<1x8x256xf32>
    tpu.vector_store %arg6[%c0_52, %c0_53, %c0_54], %182 {strides = array<i32>} : memref<1x8x256xf32, #tpu.memory_space<vmem>>, vector<1x8x256xf32>,
    return
  }
  func.func @transform_0(%arg0: i32) -> (i32, i32, i32) {
    %c0_i32 = arith.constant 0 : i32
    %c0_i32_0 = arith.constant 0 : i32
    %c0_i32_1 = arith.constant 0 : i32
    return %arg0, %c0_i32, %c0_i32_0 : i32, i32, i32
  }
  func.func @transform_1(%arg0: i32) -> (i32, i32, i32) {
    %c0_i32 = arith.constant 0 : i32
    %c0_i32_0 = arith.constant 0 : i32
    %c0_i32_1 = arith.constant 0 : i32
    return %arg0, %c0_i32, %c0_i32_0 : i32, i32, i32
  }
  func.func @transform_2(%arg0: i32) -> (i32, i32) {
    %c0_i32 = arith.constant 0 : i32
    %c0_i32_0 = arith.constant 0 : i32
    %c0_i32_1 = arith.constant 0 : i32
    return %c0_i32, %c0_i32_0 : i32, i32
  }
  func.func @transform_3(%arg0: i32) -> (i32, i32) {
    %c0_i32 = arith.constant 0 : i32
    %c0_i32_0 = arith.constant 0 : i32
    %c0_i32_1 = arith.constant 0 : i32
    return %c0_i32, %c0_i32_0 : i32, i32
  }
  func.func @transform_4(%arg0: i32) -> (i32, i32) {
    %c0_i32 = arith.constant 0 : i32
    %c0_i32_0 = arith.constant 0 : i32
    %c0_i32_1 = arith.constant 0 : i32
    return %c0_i32, %c0_i32_0 : i32, i32
  }
  func.func @transform_5(%arg0: i32) -> (i32, i32, i32) {
    %c0_i32 = arith.constant 0 : i32
    %c0_i32_0 = arith.constant 0 : i32
    %c0_i32_1 = arith.constant 0 : i32
    return %arg0, %c0_i32, %c0_i32_0 : i32, i32, i32
  }
}

</mosaic_0001>

<llo_original>
// kernel: tpu_custom_call.1
$region0: #{tpu_custom_call.1}
  #allocation0 [shape = 'u32[]', space=smem, size = 0x4, offset = 0x4, fixed_abs, tag = 'smem constant byte address 0x4 - core index']
  #allocation1 [shape = 'u32[144,128]{1,0:T(1,128)}', space=vmem, size = 0x12000, scoped, tag = 'internal scratch']
  #allocation2 [shape = 'f32[2,512]{1,0:T(2,128)}', space=vmem, size = 0x1000, scoped, tag = 'scratch operand']
  %s0 = inlined_call_operand.hbm [shape: bf16[2,4,256], index: 0, kind: input, shape index: {}]
  %s1 = inlined_call_operand.hbm [shape: bf16[2,4,256], index: 1, kind: input, shape index: {}]
  %s2 = inlined_call_operand.hbm [shape: f32[14,7], index: 2, kind: input, shape index: {}]
  %s3 = inlined_call_operand.hbm [shape: f32[8,8], index: 3, kind: input, shape index: {}]
  %s4 = inlined_call_operand.hbm [shape: f32[8,1], index: 4, kind: input, shape index: {}]
  %s5 = inlined_call_operand.hbm [shape: f32[2,8,256], index: 5, kind: output, shape index: {}]
  %s6 = sld [smem:[#allocation0]]
  $region73: #{tpu_custom_call.1} parent=0
    _
  %s8 = ssub.s32 1, %s6
  %s9 = scalar_select 0, %s8, %s6
  $region1: #{tpu_custom_call.1} parent=0
    #allocation3 [shape = 'u8[4096]{0}', space=vmem, size = 0x1000, scoped, tag = 'input window, operand 0']
    #allocation4 [shape = 's32[2]{0}', space=sflag, size = 0x8, scoped, tag = 'scoped memory for tpu_custom_call.1']
    #allocation5 [shape = 's32[2]{0}', space=sflag, size = 0x8, scoped, tag = 'scoped memory for tpu_custom_call.1']
    #allocation6 [shape = 'u8[4096]{0}', space=vmem, size = 0x1000, scoped, tag = 'input window, operand 1']
    #allocation7 [shape = 's32[2]{0}', space=sflag, size = 0x8, scoped, tag = 'scoped memory for tpu_custom_call.1']
    #allocation8 [shape = 'u8[8192]{0}', space=vmem, size = 0x2000, scoped, tag = 'input window, operand 2, single buffered']
    #allocation9 [shape = 'u8[4096]{0}', space=vmem, size = 0x1000, scoped, tag = 'input window, operand 3, single buffered']
    #allocation10 [shape = 's32[1]{0}', space=sflag, size = 0x4, scoped, tag = 'scoped memory for tpu_custom_call.1']
    #allocation11 [shape = 'u8[4096]{0}', space=vmem, size = 0x1000, scoped, tag = 'input window, operand 4, single buffered']
    #allocation12 [shape = 'u8[16384]{0}', space=vmem, size = 0x4000, scoped, tag = 'output window, operand 0']
    %10 = vsyncpa [#allocation4], 0
    %s11 = scalar_lea.sflag [#allocation4], 1
    %12 = vsyncpa %s11, 0
    %13 = vsyncpa [#allocation7], 0
    %s14 = scalar_lea.sflag [#allocation7], 1
    %15 = vsyncpa %s14, 0
    %16 = vsyncpa [#allocation10], 0
    %17 = vsyncpa [#allocation5], 0
    %s18 = scalar_lea.sflag [#allocation5], 1
    %19 = vsyncpa %s18, 0
    loop: start=0, step=1, limit=4
    $region2: #{tpu_custom_call.1} parent=1 // loop_pre_header
      _
    $region3: #{tpu_custom_call.1} parent=1 // loop_header
      %s21 = sphi 0, %s25
      %p22 = scmp.ge.s32.totalorder %s21, 4
      %s31 = sphi 0, %s33
      %s34 = sphi 0, %s31
      %s35 = sphi 0, %s34
      %s51 = sphi 0, %s35
      %s57 = sphi 0, %s59
      %s60 = sphi 0, %s57
      %s61 = sphi 0, %s60
      %s77 = sphi 0, %s61
      %s81 = sphi 0, %s81
      %s83 = sphi 0, %s81
      %s84 = sphi 0, %s83
      %s98 = sphi 0, %s84
      %s102 = sphi 0, %s102
      %s104 = sphi 0, %s102
      %s105 = sphi 0, %s104
      %s119 = sphi 0, %s105
      %s123 = sphi 0, %s123
      %s125 = sphi 0, %s123
      %s126 = sphi 0, %s125
      %s140 = sphi 0, %s126
      %s146 = sphi 0, %s148
      %s149 = sphi 0, %s146
      %s150 = sphi 0, %s149
      %s166 = sphi 0, %s150
    $region4: #{tpu_custom_call.1} parent=1 // loop_header_branch
      %24 = sbr.rel (%p22) target = $region8
    $region5: #{tpu_custom_call.1} parent=1 // loop_body
      %s26 = ssub.s32 %s21, 1
      %s27 = ssub.s32 %s21, 2
      %s28 = sadd.s32 %s21, 1
      %s29 = ssub.s32 %s21, %s28
      %p30 = scmp.eq.s32.totalorder %s29, 0
      %s32 = sadd.s32 %s31, 1
      %s33 = scalar_select %p30, %s31, %s32
      %p36 = pneg %p30
      %p37 = scmp.eq.s32.totalorder %s21, 1
      %p38 = por %p36, %p37
      %p39 = scmp.ne.s32.totalorder %s31, %s34
      %p40 = scmp.eq.s32.totalorder %s21, 0
      %p41 = por %p39, %p40
      %p42 = scmp.ne.s32.totalorder %s31, %s34
      %p43 = scmp.eq.s32.totalorder %s26, 1
      %p44 = por %p42, %p43
      %p45 = scmp.ne.s32.totalorder %s34, %s35
      %p46 = scmp.eq.s32.totalorder %s26, 0
      %p47 = por %p45, %p46
      %p48 = scmp.ne.s32.totalorder %s34, %s35
      %p49 = scmp.eq.s32.totalorder %s27, 1
      %p50 = por %p48, %p49
      %p52 = scmp.ne.s32.totalorder %s35, %s51
      %p53 = scmp.eq.s32.totalorder %s27, 0
      %p54 = por %p52, %p53
      %s55 = ssub.s32 %s21, %s28
      %p56 = scmp.eq.s32.totalorder %s55, 0
      %s58 = sadd.s32 %s57, 1
      %s59 = scalar_select %p56, %s57, %s58
      %p62 = pneg %p56
      %p63 = scmp.eq.s32.totalorder %s21, 1
      %p64 = por %p62, %p63
      %p65 = scmp.ne.s32.totalorder %s57, %s60
      %p66 = scmp.eq.s32.totalorder %s21, 0
      %p67 = por %p65, %p66
      %p68 = scmp.ne.s32.totalorder %s57, %s60
      %p69 = scmp.eq.s32.totalorder %s26, 1
      %p70 = por %p68, %p69
      %p71 = scmp.ne.s32.totalorder %s60, %s61
      %p72 = scmp.eq.s32.totalorder %s26, 0
      %p73 = por %p71, %p72
      %p74 = scmp.ne.s32.totalorder %s60, %s61
      %p75 = scmp.eq.s32.totalorder %s27, 1
      %p76 = por %p74, %p75
      %p78 = scmp.ne.s32.totalorder %s61, %s77
      %p79 = scmp.eq.s32.totalorder %s27, 0
      %p80 = por %p78, %p79
      %s82 = sadd.s32 %s81, 1
      %p85 = scmp.eq.s32.totalorder %s21, 1
      %p86 = scmp.ne.s32.totalorder %s81, %s83
      %p87 = scmp.eq.s32.totalorder %s21, 0
      %p88 = por %p86, %p87
      %p89 = scmp.ne.s32.totalorder %s81, %s83
      %p90 = scmp.eq.s32.totalorder %s26, 1
      %p91 = por %p89, %p90
      %p92 = scmp.ne.s32.totalorder %s83, %s84
      %p93 = scmp.eq.s32.totalorder %s26, 0
      %p94 = por %p92, %p93
      %p95 = scmp.ne.s32.totalorder %s83, %s84
      %p96 = scmp.eq.s32.totalorder %s27, 1
      %p97 = por %p95, %p96
      %p99 = scmp.ne.s32.totalorder %s84, %s98
      %p100 = scmp.eq.s32.totalorder %s27, 0
      %p101 = por %p99, %p100
      %s103 = sadd.s32 %s102, 1
      %p106 = scmp.eq.s32.totalorder %s21, 1
      %p107 = scmp.ne.s32.totalorder %s102, %s104
      %p108 = scmp.eq.s32.totalorder %s21, 0
      %p109 = por %p107, %p108
      %p110 = scmp.ne.s32.totalorder %s102, %s104
      %p111 = scmp.eq.s32.totalorder %s26, 1
      %p112 = por %p110, %p111
      %p113 = scmp.ne.s32.totalorder %s104, %s105
      %p114 = scmp.eq.s32.totalorder %s26, 0
      %p115 = por %p113, %p114
      %p116 = scmp.ne.s32.totalorder %s104, %s105
      %p117 = scmp.eq.s32.totalorder %s27, 1
      %p118 = por %p116, %p117
      %p120 = scmp.ne.s32.totalorder %s105, %s119
      %p121 = scmp.eq.s32.totalorder %s27, 0
      %p122 = por %p120, %p121
      %s124 = sadd.s32 %s123, 1
      %p127 = scmp.eq.s32.totalorder %s21, 1
      %p128 = scmp.ne.s32.totalorder %s123, %s125
      %p129 = scmp.eq.s32.totalorder %s21, 0
      %p130 = por %p128, %p129
      %p131 = scmp.ne.s32.totalorder %s123, %s125
      %p132 = scmp.eq.s32.totalorder %s26, 1
      %p133 = por %p131, %p132
      %p134 = scmp.ne.s32.totalorder %s125, %s126
      %p135 = scmp.eq.s32.totalorder %s26, 0
      %p136 = por %p134, %p135
      %p137 = scmp.ne.s32.totalorder %s125, %s126
      %p138 = scmp.eq.s32.totalorder %s27, 1
      %p139 = por %p137, %p138
      %p141 = scmp.ne.s32.totalorder %s126, %s140
      %p142 = scmp.eq.s32.totalorder %s27, 0
      %p143 = por %p141, %p142
      %s144 = ssub.s32 %s21, %s28
      %p145 = scmp.eq.s32.totalorder %s144, 0
      %s147 = sadd.s32 %s146, 1
      %s148 = scalar_select %p145, %s146, %s147
      %p151 = pneg %p145
      %p152 = scmp.eq.s32.totalorder %s21, 1
      %p153 = por %p151, %p152
      %p154 = scmp.ne.s32.totalorder %s146, %s149
      %p155 = scmp.eq.s32.totalorder %s21, 0
      %p156 = por %p154, %p155
      %p157 = scmp.ne.s32.totalorder %s146, %s149
      %p158 = scmp.eq.s32.totalorder %s26, 1
      %p159 = por %p157, %p158
      %p160 = scmp.ne.s32.totalorder %s149, %s150
      %p161 = scmp.eq.s32.totalorder %s26, 0
      %p162 = por %p160, %p161
      %p163 = scmp.ne.s32.totalorder %s149, %s150
      %p164 = scmp.eq.s32.totalorder %s27, 1
      %p165 = por %p163, %p164
      %p167 = scmp.ne.s32.totalorder %s150, %s166
      %p168 = scmp.eq.s32.totalorder %s27, 0
      %p169 = por %p167, %p168
      %p170 = scmp.le.s32.totalorder 1, %s21
      %p171 = scmp.lt.s32.totalorder %s21, 3
      %p172 = pnand %p170, %p171
      %p173 = pneg %p172
      // Predicated region
      $region9: #{tpu_custom_call.1} parent=5 // pred_check
        _
      $region10: #{tpu_custom_call.1} parent=5 // pred_check_branch
        %175 = sbr.rel (%p172) target = $region12
      $region11: #{tpu_custom_call.1} parent=5 // pred_region
        %s176 = ssub.s32 %s21, 1
        // Predicated region
        $region13: #{tpu_custom_call.1} parent=11 // pred_check
          %p177 = pneg %p94
        $region14: #{tpu_custom_call.1} parent=11 // pred_check_branch
          %179 = sbr.rel (%p177) target = $region16
        $region15: #{tpu_custom_call.1} parent=11 // pred_region
          %s181 = ssub.s32 256, 256
          %182 = vsyncadd [#allocation7], %s181
          %s183 = sshll.u32 [#allocation8], 4
          %s184 = int_to_ptr.vmem [resolvable:$true] %s183
          %189 = dma.hbm_to_vmem [thread:$0]  %s2, 256, %s184, [#allocation7], 128, 128, 8
        $region16: #{tpu_custom_call.1} parent=11 // pred_fallthru
          _
        // Predicated region
        $region17: #{tpu_custom_call.1} parent=11 // pred_check
          %p190 = pneg %p115
        $region18: #{tpu_custom_call.1} parent=11 // pred_check_branch
          %192 = sbr.rel (%p190) target = $region20
        $region19: #{tpu_custom_call.1} parent=11 // pred_region
          %s194 = ssub.s32 128, 128
          %195 = vsyncadd [#allocation10], %s194
          %s197 = sshll.u32 [#allocation9], 4
          %s198 = int_to_ptr.vmem [resolvable:$true] %s197
          %200 = dma.hbm_to_vmem [thread:$0]  %s3, 128, %s198, [#allocation10]
        $region20: #{tpu_custom_call.1} parent=11 // pred_fallthru
          _
        // Predicated region
        $region21: #{tpu_custom_call.1} parent=11 // pred_check
          %p201 = pneg %p136
        $region22: #{tpu_custom_call.1} parent=11 // pred_check_branch
          %203 = sbr.rel (%p201) target = $region24
        $region23: #{tpu_custom_call.1} parent=11 // pred_region
          %s205 = ssub.s32 128, 128
          %206 = vsyncadd [#allocation10], %s205
          %s208 = sshll.u32 [#allocation11], 4
          %s209 = int_to_ptr.vmem [resolvable:$true] %s208
          %211 = dma.hbm_to_vmem [thread:$0]  %s4, 128, %s209, [#allocation10]
        $region24: #{tpu_custom_call.1} parent=11 // pred_fallthru
          _
      $region12: #{tpu_custom_call.1} parent=5 // pred_fallthru
        _
      %p212 = scmp.lt.s32.totalorder %s21, 2
      // Predicated region
      $region25: #{tpu_custom_call.1} parent=5 // pred_check
        %p213 = pneg %p212
      $region26: #{tpu_custom_call.1} parent=5 // pred_check_branch
        %215 = sbr.rel (%p213) target = $region28
      $region27: #{tpu_custom_call.1} parent=5 // pred_region
        // Predicated region
        $region29: #{tpu_custom_call.1} parent=27 // pred_check
          %p216 = pneg %p41
        $region30: #{tpu_custom_call.1} parent=27 // pred_check_branch
          %218 = sbr.rel (%p216) target = $region32
        $region31: #{tpu_custom_call.1} parent=27 // pred_region
          %s219 = sand.u32 %s31, 1
          %s220 = scalar_lea.sflag [#allocation4], %s219
          %s221 = sand.u32 %s31, 1
          %s222 = smul.addr %s221, 4
          %s223 = scalar_lea.vmem [#allocation3], %s222
          %s225 = ssub.s32 64, 64
          %226 = vsyncadd %s220, %s225
          %s227 = smul.addr %s21, 2
          %s228 = smul.addr %s227, 32
          %s229 = scalar_lea.hbm %s0, %s228
          %s231 = sshll.u32 %s223, 4
          %s232 = int_to_ptr.vmem [resolvable:$true] %s231
          %234 = dma.hbm_to_vmem [thread:$0]  %s229, 64, %s232, %s220
        $region32: #{tpu_custom_call.1} parent=27 // pred_fallthru
          _
        // Predicated region
        $region33: #{tpu_custom_call.1} parent=27 // pred_check
          %p235 = pneg %p67
        $region34: #{tpu_custom_call.1} parent=27 // pred_check_branch
          %237 = sbr.rel (%p235) target = $region36
        $region35: #{tpu_custom_call.1} parent=27 // pred_region
          %s238 = sand.u32 %s21, 1
          %s239 = scalar_lea.sflag [#allocation7], %s238
          %s240 = sand.u32 %s57, 1
          %s241 = smul.addr %s240, 4
          %s242 = scalar_lea.vmem [#allocation6], %s241
          %s244 = ssub.s32 64, 64
          %245 = vsyncadd %s239, %s244
          %s246 = smul.addr %s21, 2
          %s247 = smul.addr %s246, 32
          %s248 = scalar_lea.hbm %s1, %s247
          %s250 = sshll.u32 %s242, 4
          %s251 = int_to_ptr.vmem [resolvable:$true] %s250
          %253 = dma.hbm_to_vmem [thread:$0]  %s248, 64, %s251, %s239
        $region36: #{tpu_custom_call.1} parent=27 // pred_fallthru
          _
      $region28: #{tpu_custom_call.1} parent=5 // pred_fallthru
        _
      %p254 = scmp.le.s32.totalorder 1, %s21
      %p255 = scmp.lt.s32.totalorder %s21, 3
      %p256 = pnand %p254, %p255
      %p257 = pneg %p256
      // Predicated region
      $region37: #{tpu_custom_call.1} parent=5 // pred_check
        _
      $region38: #{tpu_custom_call.1} parent=5 // pred_check_branch
        %259 = sbr.rel (%p256) target = $region40
      $region39: #{tpu_custom_call.1} parent=5 // pred_region
        %s260 = ssub.s32 %s21, 1
        %s261 = sand.u32 %s34, 1
        %s262 = scalar_lea.sflag [#allocation4], %s261
        %s263 = sand.u32 %s34, 1
        %s264 = smul.addr %s263, 4
        %s265 = scalar_lea.vmem [#allocation3], %s264
        // Predicated region
        $region41: #{tpu_custom_call.1} parent=39 // pred_check
          %p266 = pneg %p47
        $region42: #{tpu_custom_call.1} parent=39 // pred_check_branch
          %268 = sbr.rel (%p266) target = $region44
        $region43: #{tpu_custom_call.1} parent=39 // pred_region
          %269 = dma.done %s262, 64
        $region44: #{tpu_custom_call.1} parent=39 // pred_fallthru
          _
        %s270 = sand.u32 %s26, 1
        %s271 = scalar_lea.sflag [#allocation7], %s270
        %s272 = sand.u32 %s60, 1
        %s273 = smul.addr %s272, 4
        %s274 = scalar_lea.vmem [#allocation6], %s273
        // Predicated region
        $region45: #{tpu_custom_call.1} parent=39 // pred_check
          %p275 = pneg %p73
        $region46: #{tpu_custom_call.1} parent=39 // pred_check_branch
          %277 = sbr.rel (%p275) target = $region48
        $region47: #{tpu_custom_call.1} parent=39 // pred_region
          %278 = dma.done %s271, 64
        $region48: #{tpu_custom_call.1} parent=39 // pred_fallthru
          _
        // Predicated region
        $region49: #{tpu_custom_call.1} parent=39 // pred_check
          %p279 = pneg %p94
        $region50: #{tpu_custom_call.1} parent=39 // pred_check_branch
          %281 = sbr.rel (%p279) target = $region52
        $region51: #{tpu_custom_call.1} parent=39 // pred_region
          %282 = dma.done [#allocation7], 256
        $region52: #{tpu_custom_call.1} parent=39 // pred_fallthru
          _
        // Predicated region
        $region53: #{tpu_custom_call.1} parent=39 // pred_check
          %p283 = pneg %p115
        $region54: #{tpu_custom_call.1} parent=39 // pred_check_branch
          %285 = sbr.rel (%p283) target = $region56
        $region55: #{tpu_custom_call.1} parent=39 // pred_region
          %286 = dma.done [#allocation10], 128
        $region56: #{tpu_custom_call.1} parent=39 // pred_fallthru
          _
        // Predicated region
        $region57: #{tpu_custom_call.1} parent=39 // pred_check
          %p287 = pneg %p136
        $region58: #{tpu_custom_call.1} parent=39 // pred_check_branch
          %289 = sbr.rel (%p287) target = $region60
        $region59: #{tpu_custom_call.1} parent=39 // pred_region
          %290 = dma.done [#allocation10], 128
        $region60: #{tpu_custom_call.1} parent=39 // pred_fallthru
          _
        %s291 = sand.u32 %s34, 1
        %s292 = scalar_lea.sflag [#allocation4], %s291
        %s293 = sand.u32 %s34, 1
        %s294 = smul.addr %s293, 4
        %s295 = scalar_lea.vmem [#allocation3], %s294
        %p296 = pneg %p47
        %p297 = pneg %p44
        %s298 = sand.u32 %s26, 1
        %s299 = scalar_lea.sflag [#allocation7], %s298
        %s300 = sand.u32 %s60, 1
        %s301 = smul.addr %s300, 4
        %s302 = scalar_lea.vmem [#allocation6], %s301
        %p303 = pneg %p73
        %p304 = pneg %p70
        %p305 = pneg %p94
        %p306 = pneg %p91
        %p307 = pneg %p115
        %p308 = pneg %p112
        %p309 = pneg %p136
        %p310 = pneg %p133
        %p311 = pneg %p162
        %p312 = pneg %p159
        %s313 = sand.u32 %s149, 1
        %s314 = scalar_lea.sflag [#allocation5], %s313
        %s315 = sand.u32 %s149, 1
        %s316 = smul.addr %s315, 16
        %s317 = scalar_lea.vmem [#allocation12], %s316
        %v318 = vld [vmem:[%s265] sm:$0xf]
        %v319 = vld [vmem:[%s274] sm:$0xf]
        %v322 = vunpack.c.l.s4 1983009808
        %v323 = vunpack.c.0.s8 %v322
        %v324 = vlaneseq
        %v325 = vshrl.u32 %v324, 7
        %v326 = vsub.s32 %v323, %v325
        %v327 = vrot.slane %v318, %v326
        %v328 = vcombine.high %v327, %v327
        %v330 = vcombine.low %v319, %v319
        %v332 = vunpack.c.l.s4 1983009808
        %v333 = vunpack.c.0.s8 %v332
        %v334 = vlaneseq
        %v335 = vshrl.u32 %v334, 7
        %v336 = vsub.s32 %v333, %v335
        %v337 = vrot.slane %v330, %v336
        %v338 = vcombine.high %v337, %v337
        %vm339 = vcmask 1041408
        %v342 = vsel %vm339, %v327, %v337
        %v346 = vsel %vm339, %v328, %v338
        %v348 = vunpack.c.l.bf16 %v342
        %v349 = vunpack.c.l.bf16 %v346
        %v350 = vld [vmem:[#allocation9] sm:$0xff]
        %vm351 = vcmask 64512
        %v353 = vsel %vm351, %v350, 0
        %355 = vmatprep.subr.mxu0 %v349
        %356 = vmatpush1.msra.mxu0 %v348
        %357 = vmatprep.subr.mxu0 0.0
        %358 = vmatpush1.msra.mxu0 0.0
        %359 = vmatprep.subr.mxu0 0.0
        %360 = vmatpush1.msra.mxu0 0.0
        %361 = vmatprep.subr.mxu0 0.0
        %362 = vmatpush1.msra.mxu0 0.0
        %363 = vmatprep.subr.mxu0 0.0
        %364 = vmatpush1.msra.mxu0 0.0
        %365 = vmatprep.subr.mxu0 0.0
        %366 = vmatpush1.msra.mxu0 0.0
        %367 = vmatprep.subr.mxu0 0.0
        %368 = vmatpush1.msra.mxu0 0.0
        %369 = vmatprep.subr.mxu0 0.0
        %370 = vmatpush1.msra.mxu0 0.0
        %371 = vmatprep.subr.mxu0 0.0
        %372 = vmatpush1.msra.mxu0 0.0
        %373 = vmatprep.subr.mxu0 0.0
        %374 = vmatpush1.msra.mxu0 0.0
        %375 = vmatprep.subr.mxu0 0.0
        %376 = vmatpush1.msra.mxu0 0.0
        %377 = vmatprep.subr.mxu0 0.0
        %378 = vmatpush1.msra.mxu0 0.0
        %379 = vmatprep.subr.mxu0 0.0
        %380 = vmatpush1.msra.mxu0 0.0
        %381 = vmatprep.subr.mxu0 0.0
        %382 = vmatpush1.msra.mxu0 0.0
        %383 = vmatprep.subr.mxu0 0.0
        %384 = vmatpush1.msra.mxu0 0.0
        %385 = vmatprep.subr.mxu0 0.0
        %386 = vmatpush1.msra.mxu0 0.0
        %387 = vmatprep.subr.mxu0 0.0
        %388 = vmatpush1.msra.mxu0 0.0
        %389 = vmatprep.subr.mxu0 0.0
        %390 = vmatpush1.msra.mxu0 0.0
        %391 = vmatprep.subr.mxu0 0.0
        %392 = vmatpush1.msra.mxu0 0.0
        %393 = vmatprep.subr.mxu0 0.0
        %394 = vmatpush1.msra.mxu0 0.0
        %395 = vmatprep.subr.mxu0 0.0
        %396 = vmatpush1.msra.mxu0 0.0
        %397 = vmatprep.subr.mxu0 0.0
        %398 = vmatpush1.msra.mxu0 0.0
        %399 = vmatprep.subr.mxu0 0.0
        %400 = vmatpush1.msra.mxu0 0.0
        %401 = vmatprep.subr.mxu0 0.0
        %402 = vmatpush1.msra.mxu0 0.0
        %403 = vmatprep.subr.mxu0 0.0
        %404 = vmatpush1.msra.mxu0 0.0
        %405 = vmatprep.subr.mxu0 0.0
        %406 = vmatpush1.msra.mxu0 0.0
        %407 = vmatprep.subr.mxu0 0.0
        %408 = vmatpush1.msra.mxu0 0.0
        %409 = vmatprep.subr.mxu0 0.0
        %410 = vmatpush1.msra.mxu0 0.0
        %411 = vmatprep.subr.mxu0 0.0
        %412 = vmatpush1.msra.mxu0 0.0
        %413 = vmatprep.subr.mxu0 0.0
        %414 = vmatpush1.msra.mxu0 0.0
        %415 = vmatprep.subr.mxu0 0.0
        %416 = vmatpush1.msra.mxu0 0.0
        %417 = vmatprep.subr.mxu0 0.0
        %418 = vmatpush1.msra.mxu0 0.0
        %419 = vmatprep.mubr.f32.mxu0 0.0
        %420 = vmatmul.mubr.f32.gmra.mrb[0].mxu0 %v353
        %v421 = vpop.f32.mrb[0].mxu0
        %v422 = vadd.f32 0.0, %v421
        %v423 = vpop.f32.mrb[0].mxu0
        %v424 = vadd.f32 0.0, %v423
        %425 = vdwg.mxu0
        %v426 = vrot.slane %v348, 4
        %v427 = vmax.f32 %v348, %v426
        %v428 = vrot.slane %v427, 2
        %v429 = vmax.f32 %v427, %v428
        %v430 = vrot.slane %v429, 1
        %v431 = vmax.f32 %v429, %v430
        %v432 = vrot.slane %v349, 4
        %v433 = vmax.f32 %v349, %v432
        %v434 = vrot.slane %v433, 2
        %v435 = vmax.f32 %v433, %v434
        %v436 = vrot.slane %v435, 1
        %v437 = vmax.f32 %v435, %v436
        %v438 = vrot.slane %v348, 4
        %v439 = vadd.f32 %v348, %v438
        %v440 = vrot.slane %v439, 2
        %v441 = vadd.f32 %v439, %v440
        %v442 = vrot.slane %v441, 1
        %v443 = vadd.f32 %v441, %v442
        %v444 = vrot.slane %v349, 4
        %v445 = vadd.f32 %v349, %v444
        %v446 = vrot.slane %v445, 2
        %v447 = vadd.f32 %v445, %v446
        %v448 = vrot.slane %v447, 1
        %v449 = vadd.f32 %v447, %v448
        %v450 = vmul.f32 %v443, 0.125
        %v451 = vmul.f32 %v449, 0.125
        %vm452 = vcmask 1040384
        %v453 = vsel %vm452, %v431, %v450
        %v454 = vsel %vm452, %v437, %v451
        %455 = vst [vmem:[#allocation2] sm:$0x3] 0.0
        %456 = vst [vmem:[#allocation2 + $0x6] sm:$0x3] 0.0
        %v459 = vcombine.low %v453, %v454
        %v461 = vunpack.c.l.s4 1983009808
        %v462 = vunpack.c.0.s8 %v461
        %v463 = vlaneseq
        %v464 = vshrl.u32 %v463, 7
        %v465 = vsub.s32 %v462, %v464
        %v466 = vrot.slane %v459, %v465
        %468 = vst [vmem:[#allocation2 + $0x2] sm:$0xf] %v466
        %v469 = vld [vmem:[#allocation2] sm:$0xff]
        %v471 = vcombine.high %v469, %v469
        %v473 = vunpack.c.l.s4 1983009808
        %v474 = vunpack.c.0.s8 %v473
        %v475 = vlaneseq
        %v476 = vshrl.u32 %v475, 7
        %v477 = vsub.s32 %v474, %v476
        %v478 = vrot.slane %v469, %v477
        %v480 = vunpack.c.l.s4 1983009808
        %v481 = vunpack.c.0.s8 %v480
        %v482 = vlaneseq
        %v483 = vshrl.u32 %v482, 7
        %v484 = vsub.s32 %v481, %v483
        %v485 = vrot.slane %v471, %v484
        %v486 = vcombine.high %v478, %v478
        %v487 = vcombine.high %v485, %v485
        %492 = vrot.lane.b32.xlu0 %v478, 48
        %v493 = vpop.permute.xlu0 %492
        %494 = vrot.lane.b32.xlu0 %v486, 48
        %v495 = vpop.permute.xlu0 %494
        %496 = vrot.lane.b32.xlu0 %v485, 48
        %v497 = vpop.permute.xlu0 %496
        %498 = vrot.lane.b32.xlu0 %v487, 48
        %v499 = vpop.permute.xlu0 %498
        %v500 = vlaneseq
        %v501 = vand.u32 %v500, 127
        %vm502 = vcmp.lt.s32.totalorder %v501, 48
        %v503 = vsel %vm502, %v497, %v499
        %v504 = vsel %vm502, %v495, %v497
        %v505 = vsel %vm502, %v493, %v495
        %v506 = vsel %vm502, %v499, %v493
        %507 = vrot.lane.b32.xlu0 %v478, 32
        %v508 = vpop.permute.xlu0 %507
        %509 = vrot.lane.b32.xlu0 %v486, 32
        %v510 = vpop.permute.xlu0 %509
        %511 = vrot.lane.b32.xlu0 %v485, 32
        %v512 = vpop.permute.xlu0 %511
        %513 = vrot.lane.b32.xlu0 %v487, 32
        %v514 = vpop.permute.xlu0 %513
        %vm515 = vcmp.lt.s32.totalorder %v501, 32
        %v516 = vsel %vm515, %v512, %v514
        %v517 = vsel %vm515, %v510, %v512
        %v518 = vsel %vm515, %v508, %v510
        %v519 = vsel %vm515, %v514, %v508
        %520 = vrot.lane.b32.xlu0 %v478, 16
        %v521 = vpop.permute.xlu0 %520
        %522 = vrot.lane.b32.xlu0 %v486, 16
        %v523 = vpop.permute.xlu0 %522
        %524 = vrot.lane.b32.xlu0 %v485, 16
        %v525 = vpop.permute.xlu0 %524
        %526 = vrot.lane.b32.xlu0 %v487, 16
        %v527 = vpop.permute.xlu0 %526
        %vm528 = vcmp.lt.s32.totalorder %v501, 16
        %v529 = vsel %vm528, %v525, %v527
        %v530 = vsel %vm528, %v523, %v525
        %v531 = vsel %vm528, %v521, %v523
        %v532 = vsel %vm528, %v527, %v521
        %533 = vrot.lane.b32.xlu0 %v478, 112
        %v534 = vpop.permute.xlu0 %533
        %535 = vrot.lane.b32.xlu0 %v486, 112
        %v536 = vpop.permute.xlu0 %535
        %537 = vrot.lane.b32.xlu0 %v485, 112
        %v538 = vpop.permute.xlu0 %537
        %539 = vrot.lane.b32.xlu0 %v487, 112
        %v540 = vpop.permute.xlu0 %539
        %vm541 = vcmp.lt.s32.totalorder %v501, 112
        %v542 = vsel %vm541, %v538, %v540
        %v543 = vsel %vm541, %v536, %v538
        %v544 = vsel %vm541, %v534, %v536
        %v545 = vsel %vm541, %v540, %v534
        %546 = vrot.lane.b32.xlu0 %v478, 96
        %v547 = vpop.permute.xlu0 %546
        %548 = vrot.lane.b32.xlu0 %v486, 96
        %v549 = vpop.permute.xlu0 %548
        %550 = vrot.lane.b32.xlu0 %v485, 96
        %v551 = vpop.permute.xlu0 %550
        %552 = vrot.lane.b32.xlu0 %v487, 96
        %v553 = vpop.permute.xlu0 %552
        %vm554 = vcmp.lt.s32.totalorder %v501, 96
        %v555 = vsel %vm554, %v551, %v553
        %v556 = vsel %vm554, %v549, %v551
        %v557 = vsel %vm554, %v547, %v549
        %v558 = vsel %vm554, %v553, %v547
        %559 = vrot.lane.b32.xlu0 %v478, 80
        %v560 = vpop.permute.xlu0 %559
        %561 = vrot.lane.b32.xlu0 %v486, 80
        %v562 = vpop.permute.xlu0 %561
        %563 = vrot.lane.b32.xlu0 %v485, 80
        %v564 = vpop.permute.xlu0 %563
        %565 = vrot.lane.b32.xlu0 %v487, 80
        %v566 = vpop.permute.xlu0 %565
        %vm567 = vcmp.lt.s32.totalorder %v501, 80
        %v568 = vsel %vm567, %v564, %v566
        %v569 = vsel %vm567, %v562, %v564
        %v570 = vsel %vm567, %v560, %v562
        %v571 = vsel %vm567, %v566, %v560
        %v576 = vrot.slane %v519, 6
        %v577 = vrot.slane %v518, 6
        %v578 = vrot.slane %v517, 6
        %v579 = vrot.slane %v516, 6
        %v588 = vrot.slane %v532, 4
        %v589 = vrot.slane %v531, 4
        %v590 = vrot.slane %v530, 4
        %v591 = vrot.slane %v529, 4
        %v596 = vcombine.low %v469, %v469
        %v598 = vunpack.c.l.s4 1983009808
        %v599 = vunpack.c.0.s8 %v598
        %v600 = vlaneseq
        %v601 = vshrl.u32 %v600, 7
        %v602 = vsub.s32 %v599, %v601
        %v603 = vrot.slane %v596, %v602
        %v604 = vcombine.low %v603, %v603
        %v605 = vcombine.low %v478, %v478
        %v613 = vrot.slane %v557, 6
        %v614 = vrot.slane %v556, 6
        %v615 = vrot.slane %v555, 6
        %v616 = vrot.slane %v558, 6
        %v625 = vrot.slane %v570, 4
        %v626 = vrot.slane %v569, 4
        %v627 = vrot.slane %v568, 4
        %v628 = vrot.slane %v571, 4
        %v633 = vsel %vm339, %v506, %v576
        %v634 = vsel %vm339, %v505, %v577
        %v635 = vsel %vm339, %v504, %v578
        %v636 = vsel %vm339, %v503, %v579
        %vm637 = vcmask 1043456
        %v638 = vsel %vm637, %v633, %v588
        %v639 = vsel %vm637, %v634, %v589
        %v640 = vsel %vm637, %v635, %v590
        %v641 = vsel %vm637, %v636, %v591
        %vm642 = vcmask 1045504
        %v643 = vsel %vm642, %v638, %v604
        %v644 = vsel %vm642, %v639, %v603
        %v645 = vsel %vm642, %v640, %v605
        %v646 = vsel %vm642, %v641, %v478
        %v647 = vsel %vm339, %v544, %v613
        %v648 = vsel %vm339, %v543, %v614
        %v649 = vsel %vm339, %v542, %v615
        %v650 = vsel %vm339, %v545, %v616
        %v651 = vsel %vm637, %v647, %v625
        %v652 = vsel %vm637, %v648, %v626
        %v653 = vsel %vm637, %v649, %v627
        %v654 = vsel %vm637, %v650, %v628
        %v655 = vld [vmem:[#allocation8] sm:$0xff]
        %v656 = vld [vmem:[#allocation8 + $0x8] sm:$0x3f]
        %v657 = vadd.s32 %v501, 128
        %vm658 = vcmp.lt.s32.totalorder %v501, 0
        %v659 = vsub.s32 0, %v501
        %v660 = vsel %vm658, %v659, %v501
        %v661 = vshrl.u32 %v660, 4
        %v662 = vand.u32 %v660, 15
        %v663 = vsub.s32 0, %v662
        %v664 = vsel %vm658, %v663, %v662
        %vm665 = vcmp.lt.s32.totalorder %v657, 0
        %v666 = vsub.s32 0, %v657
        %v667 = vsel %vm665, %v666, %v657
        %v668 = vshrl.u32 %v667, 4
        %v669 = vand.u32 %v667, 15
        %v670 = vsub.s32 0, %v669
        %v671 = vsel %vm665, %v670, %v669
        %vm672 = vcmp.ne.s32.totalorder %v664, 0
        %vm673 = vcmp.ne.s32.totalorder %v671, 0
        %vm674 = vcmp.lt.s32.totalorder %v664, 0
        %vm675 = vcmp.lt.s32.totalorder %v671, 0
        %vm676 = vmand %vm674, %vm672
        %vm677 = vmand %vm675, %vm673
        %v678 = vadd.s32 %v664, 16
        %v679 = vadd.s32 %v671, 16
        %v680 = vsel %vm676, %v678, %v664
        %v681 = vsel %vm677, %v679, %v671
        %682 = vrot.lane.b32.xlu0 %v643, 3
        %v683 = vpop.permute.xlu0 %682
        %684 = vrot.lane.b32.xlu0 %v651, 3
        %v685 = vpop.permute.xlu0 %684
        %686 = vrot.lane.b32.xlu0 %v644, 3
        %v687 = vpop.permute.xlu0 %686
        %688 = vrot.lane.b32.xlu0 %v652, 3
        %v689 = vpop.permute.xlu0 %688
        %690 = vrot.lane.b32.xlu0 %v645, 3
        %v691 = vpop.permute.xlu0 %690
        %692 = vrot.lane.b32.xlu0 %v653, 3
        %v693 = vpop.permute.xlu0 %692
        %vm694 = vcmp.lt.s32.totalorder %v501, 3
        %v695 = vsel %vm694, %v687, %v691
        %v696 = vsel %vm694, %v689, %v693
        %v697 = vsel %vm694, %v683, %v687
        %v698 = vsel %vm694, %v685, %v689
        %700 = vset.pattern.permute.xlu0 0
        %701 = vperm.xlu0 %700, %v655
        %v702 = vpop.permute.xlu0 %701
        %705 = vset.pattern.permute.xlu0 0
        %706 = vperm.xlu0 %705, %v656
        %v707 = vpop.permute.xlu0 %706
        %v709 = vmul.f32 %v702, %v697
        %v710 = vmul.f32 %v702, %v695
        %v711 = vmul.f32 %v707, %v698
        %v712 = vmul.f32 %v707, %v696
        %v713 = vadd.s32 %v680, 4294967293
        %v714 = vadd.s32 %v681, 4294967293
        %vm715 = vcmp.ge.s32.totalorder %v713, 0
        %vm716 = vcmp.ge.s32.totalorder %v714, 0
        %vm717 = vcmp.lt.s32.totalorder %v713, 16
        %vm718 = vcmp.lt.s32.totalorder %v714, 16
        %vm719 = vmand %vm715, %vm717
        %vm720 = vmand %vm716, %vm718
        %v721 = vsel %vm719, 1, 0
        %v722 = vsel %vm720, 1, 0
        %v723 = vcvt.s32.f32 %v721
        %v724 = vcvt.s32.f32 %v722
        %v725 = vmul.f32 %v709, %v723
        %v726 = vmul.f32 %v710, %v724
        %v727 = vmul.f32 %v711, %v723
        %v728 = vmul.f32 %v712, %v724
        %v729 = vadd.f32 %v725, 0.0
        %v730 = vadd.f32 %v726, 0.0
        %v731 = vadd.f32 %v727, 0.0
        %v732 = vadd.f32 %v728, 0.0
        %733 = vrot.lane.b32.xlu0 %v643, 2
        %v734 = vpop.permute.xlu0 %733
        %735 = vrot.lane.b32.xlu0 %v651, 2
        %v736 = vpop.permute.xlu0 %735
        %737 = vrot.lane.b32.xlu0 %v644, 2
        %v738 = vpop.permute.xlu0 %737
        %739 = vrot.lane.b32.xlu0 %v652, 2
        %v740 = vpop.permute.xlu0 %739
        %741 = vrot.lane.b32.xlu0 %v645, 2
        %v742 = vpop.permute.xlu0 %741
        %743 = vrot.lane.b32.xlu0 %v653, 2
        %v744 = vpop.permute.xlu0 %743
        %vm745 = vcmp.lt.s32.totalorder %v501, 2
        %v746 = vsel %vm745, %v738, %v742
        %v747 = vsel %vm745, %v740, %v744
        %v748 = vsel %vm745, %v734, %v738
        %v749 = vsel %vm745, %v736, %v740
        %750 = vset.pattern.permute.xlu0 1
        %751 = vperm.xlu0 %750, %v655
        %v752 = vpop.permute.xlu0 %751
        %754 = vset.pattern.permute.xlu0 1
        %755 = vperm.xlu0 %754, %v656
        %v756 = vpop.permute.xlu0 %755
        %v758 = vmul.f32 %v752, %v748
        %v759 = vmul.f32 %v752, %v746
        %v760 = vmul.f32 %v756, %v749
        %v761 = vmul.f32 %v756, %v747
        %v762 = vadd.s32 %v680, 4294967294
        %v763 = vadd.s32 %v681, 4294967294
        %vm764 = vcmp.ge.s32.totalorder %v762, 0
        %vm765 = vcmp.ge.s32.totalorder %v763, 0
        %vm766 = vcmp.lt.s32.totalorder %v762, 16
        %vm767 = vcmp.lt.s32.totalorder %v763, 16
        %vm768 = vmand %vm764, %vm766
        %vm769 = vmand %vm765, %vm767
        %v770 = vsel %vm768, 1, 0
        %v771 = vsel %vm769, 1, 0
        %v772 = vcvt.s32.f32 %v770
        %v773 = vcvt.s32.f32 %v771
        %v774 = vmul.f32 %v758, %v772
        %v775 = vmul.f32 %v759, %v773
        %v776 = vmul.f32 %v760, %v772
        %v777 = vmul.f32 %v761, %v773
        %v778 = vadd.f32 %v729, %v774
        %v779 = vadd.f32 %v730, %v775
        %v780 = vadd.f32 %v731, %v776
        %v781 = vadd.f32 %v732, %v777
        %782 = vrot.lane.b32.xlu0 %v643, 1
        %v783 = vpop.permute.xlu0 %782
        %784 = vrot.lane.b32.xlu0 %v651, 1
        %v785 = vpop.permute.xlu0 %784
        %786 = vrot.lane.b32.xlu0 %v644, 1
        %v787 = vpop.permute.xlu0 %786
        %788 = vrot.lane.b32.xlu0 %v652, 1
        %v789 = vpop.permute.xlu0 %788
        %790 = vrot.lane.b32.xlu0 %v645, 1
        %v791 = vpop.permute.xlu0 %790
        %792 = vrot.lane.b32.xlu0 %v653, 1
        %v793 = vpop.permute.xlu0 %792
        %vm794 = vcmp.lt.s32.totalorder %v501, 1
        %v795 = vsel %vm794, %v787, %v791
        %v796 = vsel %vm794, %v789, %v793
        %v797 = vsel %vm794, %v783, %v787
        %v798 = vsel %vm794, %v785, %v789
        %799 = vset.pattern.permute.xlu0 2
        %800 = vperm.xlu0 %799, %v655
        %v801 = vpop.permute.xlu0 %800
        %803 = vset.pattern.permute.xlu0 2
        %804 = vperm.xlu0 %803, %v656
        %v805 = vpop.permute.xlu0 %804
        %v807 = vmul.f32 %v801, %v797
        %v808 = vmul.f32 %v801, %v795
        %v809 = vmul.f32 %v805, %v798
        %v810 = vmul.f32 %v805, %v796
        %v811 = vadd.s32 %v680, 4294967295
        %v812 = vadd.s32 %v681, 4294967295
        %vm813 = vcmp.ge.s32.totalorder %v811, 0
        %vm814 = vcmp.ge.s32.totalorder %v812, 0
        %vm815 = vcmp.lt.s32.totalorder %v811, 16
        %vm816 = vcmp.lt.s32.totalorder %v812, 16
        %vm817 = vmand %vm813, %vm815
        %vm818 = vmand %vm814, %vm816
        %v819 = vsel %vm817, 1, 0
        %v820 = vsel %vm818, 1, 0
        %v821 = vcvt.s32.f32 %v819
        %v822 = vcvt.s32.f32 %v820
        %v823 = vmul.f32 %v807, %v821
        %v824 = vmul.f32 %v808, %v822
        %v825 = vmul.f32 %v809, %v821
        %v826 = vmul.f32 %v810, %v822
        %v827 = vadd.f32 %v778, %v823
        %v828 = vadd.f32 %v779, %v824
        %v829 = vadd.f32 %v780, %v825
        %v830 = vadd.f32 %v781, %v826
        %831 = vset.pattern.permute.xlu0 3
        %832 = vperm.xlu0 %831, %v655
        %v833 = vpop.permute.xlu0 %832
        %835 = vset.pattern.permute.xlu0 3
        %836 = vperm.xlu0 %835, %v656
        %v837 = vpop.permute.xlu0 %836
        %v839 = vmul.f32 %v833, %v644
        %v840 = vmul.f32 %v833, %v645
        %v841 = vmul.f32 %v837, %v652
        %v842 = vmul.f32 %v837, %v653
        %v843 = vadd.f32 %v827, %v839
        %v844 = vadd.f32 %v828, %v840
        %v845 = vadd.f32 %v829, %v841
        %v846 = vadd.f32 %v830, %v842
        %847 = vrot.lane.b32.xlu0 %v644, 127
        %v848 = vpop.permute.xlu0 %847
        %849 = vrot.lane.b32.xlu0 %v652, 127
        %v850 = vpop.permute.xlu0 %849
        %851 = vrot.lane.b32.xlu0 %v645, 127
        %v852 = vpop.permute.xlu0 %851
        %853 = vrot.lane.b32.xlu0 %v653, 127
        %v854 = vpop.permute.xlu0 %853
        %855 = vrot.lane.b32.xlu0 %v646, 127
        %v856 = vpop.permute.xlu0 %855
        %857 = vrot.lane.b32.xlu0 %v654, 127
        %v858 = vpop.permute.xlu0 %857
        %vm859 = vcmp.lt.s32.totalorder %v501, 127
        %v860 = vsel %vm859, %v852, %v856
        %v861 = vsel %vm859, %v854, %v858
        %v862 = vsel %vm859, %v848, %v852
        %v863 = vsel %vm859, %v850, %v854
        %864 = vset.pattern.permute.xlu0 4
        %865 = vperm.xlu0 %864, %v655
        %v866 = vpop.permute.xlu0 %865
        %868 = vset.pattern.permute.xlu0 4
        %869 = vperm.xlu0 %868, %v656
        %v870 = vpop.permute.xlu0 %869
        %v872 = vmul.f32 %v866, %v862
        %v873 = vmul.f32 %v866, %v860
        %v874 = vmul.f32 %v870, %v863
        %v875 = vmul.f32 %v870, %v861
        %v876 = vadd.s32 %v680, 1
        %v877 = vadd.s32 %v681, 1
        %vm878 = vcmp.ge.s32.totalorder %v876, 0
        %vm879 = vcmp.ge.s32.totalorder %v877, 0
        %vm880 = vcmp.lt.s32.totalorder %v876, 16
        %vm881 = vcmp.lt.s32.totalorder %v877, 16
        %vm882 = vmand %vm878, %vm880
        %vm883 = vmand %vm879, %vm881
        %v884 = vsel %vm882, 1, 0
        %v885 = vsel %vm883, 1, 0
        %v886 = vcvt.s32.f32 %v884
        %v887 = vcvt.s32.f32 %v885
        %v888 = vmul.f32 %v872, %v886
        %v889 = vmul.f32 %v873, %v887
        %v890 = vmul.f32 %v874, %v886
        %v891 = vmul.f32 %v875, %v887
        %v892 = vadd.f32 %v843, %v888
        %v893 = vadd.f32 %v844, %v889
        %v894 = vadd.f32 %v845, %v890
        %v895 = vadd.f32 %v846, %v891
        %896 = vrot.lane.b32.xlu0 %v644, 126
        %v897 = vpop.permute.xlu0 %896
        %898 = vrot.lane.b32.xlu0 %v652, 126
        %v899 = vpop.permute.xlu0 %898
        %900 = vrot.lane.b32.xlu0 %v645, 126
        %v901 = vpop.permute.xlu0 %900
        %902 = vrot.lane.b32.xlu0 %v653, 126
        %v903 = vpop.permute.xlu0 %902
        %904 = vrot.lane.b32.xlu0 %v646, 126
        %v905 = vpop.permute.xlu0 %904
        %906 = vrot.lane.b32.xlu0 %v654, 126
        %v907 = vpop.permute.xlu0 %906
        %vm908 = vcmp.lt.s32.totalorder %v501, 126
        %v909 = vsel %vm908, %v901, %v905
        %v910 = vsel %vm908, %v903, %v907
        %v911 = vsel %vm908, %v897, %v901
        %v912 = vsel %vm908, %v899, %v903
        %913 = vset.pattern.permute.xlu0 5
        %914 = vperm.xlu0 %913, %v655
        %v915 = vpop.permute.xlu0 %914
        %917 = vset.pattern.permute.xlu0 5
        %918 = vperm.xlu0 %917, %v656
        %v919 = vpop.permute.xlu0 %918
        %v921 = vmul.f32 %v915, %v911
        %v922 = vmul.f32 %v915, %v909
        %v923 = vmul.f32 %v919, %v912
        %v924 = vmul.f32 %v919, %v910
        %v925 = vadd.s32 %v680, 2
        %v926 = vadd.s32 %v681, 2
        %vm927 = vcmp.ge.s32.totalorder %v925, 0
        %vm928 = vcmp.ge.s32.totalorder %v926, 0
        %vm929 = vcmp.lt.s32.totalorder %v925, 16
        %vm930 = vcmp.lt.s32.totalorder %v926, 16
        %vm931 = vmand %vm927, %vm929
        %vm932 = vmand %vm928, %vm930
        %v933 = vsel %vm931, 1, 0
        %v934 = vsel %vm932, 1, 0
        %v935 = vcvt.s32.f32 %v933
        %v936 = vcvt.s32.f32 %v934
        %v937 = vmul.f32 %v921, %v935
        %v938 = vmul.f32 %v922, %v936
        %v939 = vmul.f32 %v923, %v935
        %v940 = vmul.f32 %v924, %v936
        %v941 = vadd.f32 %v892, %v937
        %v942 = vadd.f32 %v893, %v938
        %v943 = vadd.f32 %v894, %v939
        %v944 = vadd.f32 %v895, %v940
        %945 = vrot.lane.b32.xlu0 %v644, 125
        %v946 = vpop.permute.xlu0 %945
        %947 = vrot.lane.b32.xlu0 %v652, 125
        %v948 = vpop.permute.xlu0 %947
        %949 = vrot.lane.b32.xlu0 %v645, 125
        %v950 = vpop.permute.xlu0 %949
        %951 = vrot.lane.b32.xlu0 %v653, 125
        %v952 = vpop.permute.xlu0 %951
        %953 = vrot.lane.b32.xlu0 %v646, 125
        %v954 = vpop.permute.xlu0 %953
        %955 = vrot.lane.b32.xlu0 %v654, 125
        %v956 = vpop.permute.xlu0 %955
        %vm957 = vcmp.lt.s32.totalorder %v501, 125
        %v958 = vsel %vm957, %v950, %v954
        %v959 = vsel %vm957, %v952, %v956
        %v960 = vsel %vm957, %v946, %v950
        %v961 = vsel %vm957, %v948, %v952
        %962 = vset.pattern.permute.xlu0 6
        %963 = vperm.xlu0 %962, %v655
        %v964 = vpop.permute.xlu0 %963
        %966 = vset.pattern.permute.xlu0 6
        %967 = vperm.xlu0 %966, %v656
        %v968 = vpop.permute.xlu0 %967
        %v970 = vmul.f32 %v964, %v960
        %v971 = vmul.f32 %v964, %v958
        %v972 = vmul.f32 %v968, %v961
        %v973 = vmul.f32 %v968, %v959
        %v974 = vadd.s32 %v680, 3
        %v975 = vadd.s32 %v681, 3
        %vm976 = vcmp.ge.s32.totalorder %v974, 0
        %vm977 = vcmp.ge.s32.totalorder %v975, 0
        %vm978 = vcmp.lt.s32.totalorder %v974, 16
        %vm979 = vcmp.lt.s32.totalorder %v975, 16
        %vm980 = vmand %vm976, %vm978
        %vm981 = vmand %vm977, %vm979
        %v982 = vsel %vm980, 1, 0
        %v983 = vsel %vm981, 1, 0
        %v984 = vcvt.s32.f32 %v982
        %v985 = vcvt.s32.f32 %v983
        %v986 = vmul.f32 %v970, %v984
        %v987 = vmul.f32 %v971, %v985
        %v988 = vmul.f32 %v972, %v984
        %v989 = vmul.f32 %v973, %v985
        %v990 = vadd.f32 %v941, %v986
        %v991 = vadd.f32 %v942, %v987
        %v992 = vadd.f32 %v943, %v988
        %v993 = vadd.f32 %v944, %v989
        %v994 = vsel %vm642, %v992, 0.0
        %v995 = vadd.f32 %v990, %v994
        %v996 = vrot.slane %v995, 4
        %v997 = vadd.f32 %v995, %v996
        %v998 = vrot.slane %v997, 2
        %v999 = vadd.f32 %v997, %v998
        %v1000 = vrot.slane %v999, 1
        %v1001 = vadd.f32 %v999, %v1000
        %v1002 = vsel %vm642, %v993, 0.0
        %v1003 = vadd.f32 %v991, %v1002
        %v1004 = vrot.slane %v1003, 4
        %v1005 = vadd.f32 %v1003, %v1004
        %v1006 = vrot.slane %v1005, 2
        %v1007 = vadd.f32 %v1005, %v1006
        %v1008 = vrot.slane %v1007, 1
        %v1009 = vadd.f32 %v1007, %v1008
        %v1010 = vxor.u32 %v1001, 2147483648
        %v1011 = vxor.u32 %v1009, 2147483648
        %v1012 = vmul.f32 %v1010, 1.442695
        %v1013 = vpow.pop %v1012
        %v1014 = vmul.f32 %v1011, 1.442695
        %v1015 = vpow.pop %v1014
        %v1016 = vadd.f32 %v1013, 1.0
        %v1017 = vadd.f32 %v1015, 1.0
        %v1018 = vrcp.pop %v1016
        %v1019 = vmul.f32 1.0, %v1018
        %v1020 = vrcp.pop %v1017
        %v1021 = vmul.f32 1.0, %v1020
        %v1022 = vmul.f32 %v422, %v1019
        %v1023 = vmul.f32 %v424, %v1021
        %v1024 = vld [vmem:[#allocation11] sm:$0xff]
        %1026 = vset.pattern.permute.xlu0 0
        %1027 = vperm.xlu0 %1026, %v1024
        %v1028 = vpop.permute.xlu0 %1027
        %v1030 = vadd.f32 %v1022, %v1028
        %v1031 = vadd.f32 %v1023, %v1028
        %v1032 = vmax.f32 %v1030, 0.0
        %v1033 = vmax.f32 %v1031, 0.0
        %1034 = vst [vmem:[%s317] sm:$0xff] %v1032
        %1035 = vst [vmem:[%s317 + $0x8] sm:$0xff] %v1033
        %s1036 = sand.u32 %s149, 1
        %s1037 = scalar_lea.sflag [#allocation5], %s1036
        %s1038 = sand.u32 %s149, 1
        %s1039 = smul.addr %s1038, 16
        %s1040 = scalar_lea.vmem [#allocation12], %s1039
        // Predicated region
        $region61: #{tpu_custom_call.1} parent=39 // pred_check
          %p1041 = pneg %p159
        $region62: #{tpu_custom_call.1} parent=39 // pred_check_branch
          %1043 = sbr.rel (%p1041) target = $region64
        $region63: #{tpu_custom_call.1} parent=39 // pred_region
          %s1045 = ssub.s32 256, 256
          %1046 = vsyncadd %s1037, %s1045
          %s1047 = smul.addr %s26, 2
          %s1048 = smul.addr %s1047, 128
          %s1049 = scalar_lea.hbm %s5, %s1048
          %s1051 = sshll.u32 %s1040, 4
          %s1052 = int_to_ptr.vmem [resolvable:$true] %s1051
          %1054 = dma.vmem_to_hbm [thread:$0]  %s1052, 256, %s1049, %s1037
        $region64: #{tpu_custom_call.1} parent=39 // pred_fallthru
          _
      $region40: #{tpu_custom_call.1} parent=5 // pred_fallthru
        _
      %p1055 = scmp.le.s32.totalorder 2, %s21
      // Predicated region
      $region65: #{tpu_custom_call.1} parent=5 // pred_check
        %p1056 = pneg %p1055
      $region66: #{tpu_custom_call.1} parent=5 // pred_check_branch
        %1058 = sbr.rel (%p1056) target = $region68
      $region67: #{tpu_custom_call.1} parent=5 // pred_region
        %s1059 = ssub.s32 %s21, 2
        // Predicated region
        $region69: #{tpu_custom_call.1} parent=67 // pred_check
          %p1060 = pneg %p165
        $region70: #{tpu_custom_call.1} parent=67 // pred_check_branch
          %1062 = sbr.rel (%p1060) target = $region72
        $region71: #{tpu_custom_call.1} parent=67 // pred_region
          %s1063 = sand.u32 %s150, 1
          %s1064 = scalar_lea.sflag [#allocation5], %s1063
          %s1065 = sand.u32 %s150, 1
          %s1066 = smul.addr %s1065, 16
          %s1067 = scalar_lea.vmem [#allocation12], %s1066
          %1068 = dma.done %s1064, 256
        $region72: #{tpu_custom_call.1} parent=67 // pred_fallthru
          _
      $region68: #{tpu_custom_call.1} parent=5 // pred_fallthru
        _
    $region6: #{tpu_custom_call.1} parent=1 // loop_footer
      %s25 = sadd.s32 1, %s21
    $region7: #{tpu_custom_call.1} parent=1 // loop_footer_branch
      %20 = sbr.rel target = $region3
    $region8: #{tpu_custom_call.1} parent=1 // loop_exit
      _
    %1069 = vsyncpa [#allocation4], 1
    %s1070 = scalar_lea.sflag [#allocation4], 1
    %1071 = vsyncpa %s1070, 1
    %1072 = vsyncpa [#allocation7], 1
    %s1073 = scalar_lea.sflag [#allocation7], 1
    %1074 = vsyncpa %s1073, 1
    %1075 = vsyncpa [#allocation10], 1
    %1076 = vsyncpa [#allocation5], 1
    %s1077 = scalar_lea.sflag [#allocation5], 1
    %1078 = vsyncpa %s1077, 1

</llo_original>
